<compile_context>
chip_gen: v7x
topology: tpu7x:2x2x1
jax: 0.10.0
libtpu: 0.0.40
codegen_flags: <defaults>
</compile_context>

<pallas_src>
import jax
import jax.numpy as jnp
from jax.experimental import pallas as pl
from jax.experimental.pallas import tpu as pltpu


def _resnet_const_kernel(x_hbm_ref, o_ref):
    # Matches `x = 2; return x`: the input ref is intentionally never read
    # (it lives in HBM via pl.ANY, so no DMA is ever issued for it); the
    # output is the scalar constant 2 written straight to SMEM.
    del x_hbm_ref
    o_ref[0] = jnp.int32(2)


def resnet_forward(x: jax.Array) -> jax.Array:
    """Pallas implementation of ResNet.forward.

    The reference module ignores `x` and returns the constant 2.  Here the
    (unused) input is kept as an operand for API parity but stays in HBM
    (memory_space=pl.ANY), and the constant is emitted as a (1,) int32 SMEM
    scalar output.

    Args:
      x: NCHW input array (ignored by the reference forward).
    Returns:
      A (1,) int32 device array holding the value 2.
    """
    return pl.pallas_call(
        _resnet_const_kernel,
        out_shape=jax.ShapeDtypeStruct((1,), jnp.int32),
        in_specs=[
            # Unused input: leave it in place (HBM), no auto-DMA, no VMEM use.
            pl.BlockSpec(memory_space=pl.ANY),
        ],
        out_specs=pl.BlockSpec(memory_space=pltpu.SMEM),
    )(x)


if __name__ == "__main__":
    key = jax.random.PRNGKey(0)
    # Small NCHW input consistent with a ResNet backbone call signature.
    x = jax.random.normal(key, (2, 4, 16, 16), dtype=jnp.float32)

    out = resnet_forward(x)
    out = jax.block_until_ready(out)

    # Verification only (not the hot path): the module returns the value 2.
    assert int(out[0]) == 2, f"expected 2, got {int(out[0])}"
    print("KERNEL_OK")
</pallas_src>

<mosaic_0001>
module attributes {stable_mosaic.version = 11 : i64} {
  func.func @_resnet_const_kernel(%arg0: memref<2x4x16x16xf32, #tpu.memory_space<any>>, %arg1: memref<1xi32, #tpu.memory_space<smem>>) attributes {dimension_semantics = [], scalar_prefetch = 0 : i64, scratch_operands = 0 : i64, tpu.core_type = #tpu.core_type<tc>} {
    %c2_i32 = arith.constant 2 : i32
    %c0 = arith.constant 0 : index
    %0 = memref.load %arg1[%c0] : memref<1xi32, #tpu.memory_space<smem>>
    memref.store %c2_i32, %arg1[%c0] : memref<1xi32, #tpu.memory_space<smem>>
    return
  }
}

</mosaic_0001>

<llo_original>
// kernel: tpu_custom_call.1
$region0: #{tpu_custom_call.1}
  #allocation0 [shape = 'u32[]', space=smem, size = 0x4, offset = 0x4, fixed_abs, tag = 'smem constant byte address 0x4 - core index']
  #allocation1 [shape = 'u32[144,128]{1,0:T(1,128)}', space=vmem, size = 0x12000, scoped, tag = 'internal scratch']
  %s0 = inlined_call_operand.hbm [shape: f32[2,4,16,16], index: 0, kind: input, shape index: {}]
  %s1 = inlined_call_operand.hbm [shape: s32[1], index: 1, kind: output, shape index: {}]
  %s2 = sld [smem:[#allocation0]]
  $region10: #{tpu_custom_call.1} parent=0
    _
  %s4 = ssub.s32 1, %s2
  %s5 = scalar_select 0, %s4, %s2
  $region1: #{tpu_custom_call.1} parent=0
    #allocation2 [shape = 'u8[512]{0}', space=smem, size = 0x200, scoped, tag = 'output window, operand 0, single buffered']
    #allocation3 [shape = 's32[1]{0}', space=sflag, size = 0x4, scoped, tag = 'scoped memory for tpu_custom_call.1']
    %6 = vsyncpa [#allocation3], 0
    %s7 = scalar_lea.smem [#allocation2], 0
    %8 = sst [smem:[%s7]] 2
    // Predicated region
    $region2: #{tpu_custom_call.1} parent=1 // pred_check
      _
    $region3: #{tpu_custom_call.1} parent=1 // pred_check_branch
      %10 = sbr.rel (0) target = $region5
    $region4: #{tpu_custom_call.1} parent=1 // pred_region
      %s12 = ssub.s32 16, 16
      %13 = vsyncadd [#allocation3], %s12
      %16 = dma.smem_to_hbm [#allocation2], 16, %s1, [#allocation3]
    $region5: #{tpu_custom_call.1} parent=1 // pred_fallthru
      _
    // Predicated region
    $region6: #{tpu_custom_call.1} parent=1 // pred_check
      _
    $region7: #{tpu_custom_call.1} parent=1 // pred_check_branch
      %18 = sbr.rel (0) target = $region9
    $region8: #{tpu_custom_call.1} parent=1 // pred_region
      %19 = dma.done [#allocation3], 16
    $region9: #{tpu_custom_call.1} parent=1 // pred_fallthru
      _
    %20 = sfence
    %21 = vsyncpa [#allocation3], 1

</llo_original>
